<compile_context>
chip_gen: v7x
topology: tpu7x:2x2x1
jax: 0.10.0
libtpu: 0.0.40
codegen_flags: <defaults>
</compile_context>

<pallas_src>
import functools

import jax
import jax.numpy as jnp
from jax.experimental import pallas as pl
from jax.experimental.pallas import tpu as pltpu


def _fused_conv_bn_relu_kernel(p_ref, w_ref, gamma_ref, beta_ref, o_ref,
                               *, n_images, m_per_image, eps):
    """Fused im2col-matmul + train-mode BatchNorm + ReLU for the whole batch.

    p_ref:     [K, N*M]       bf16  (im2col patches, batch folded into lanes)
    w_ref:     [Cout, K]      bf16
    gamma_ref: [Cout, 1]      f32
    beta_ref:  [Cout, 1]      f32
    o_ref:     [N, Cout, M]   f32   (flattened NCHW -> free reshape in the wrapper)
    """
    # One MXU matmul for the whole batch; f32 accumulation.
    y = jnp.dot(w_ref[...], p_ref[...], preferred_element_type=jnp.float32)  # [Cout, N*M]

    # Full-batch per-channel statistics (lane reduction -> XLU slot), all f32.
    count = jnp.float32(n_images * m_per_image)
    mean = jnp.sum(y, axis=-1, keepdims=True) / count                        # [Cout, 1]
    ex2 = jnp.sum(y * y, axis=-1, keepdims=True) / count                     # [Cout, 1]
    var = jnp.maximum(ex2 - mean * mean, 0.0)                                # biased variance
    inv_std = jax.lax.rsqrt(var + jnp.float32(eps))                          # EUP

    scale = gamma_ref[...] * inv_std                                         # [Cout, 1]
    shift = beta_ref[...] - mean * scale                                     # [Cout, 1]

    z = jnp.maximum(y * scale + shift, 0.0)                                  # [Cout, N*M]

    # Store per-image lane-dense [Cout, M] slabs (static unroll over the small batch).
    for n in range(n_images):
        o_ref[n] = z[:, n * m_per_image:(n + 1) * m_per_image].astype(o_ref.dtype)


def basic_conv2d(x_nchw, conv_weight_oihw, bn_gamma, bn_beta, *,
                 stride=1, padding=0, dilation=1, eps=1e-5):
    """Forward of BasicConv2d. Input/output are NCHW (PyTorch convention).

    TODO(synk): PyTorch BatchNorm2d in train mode also updates running_mean/running_var;
    only the forward activation is produced here (matches the module's return value).
    """
    N, Cin, H, W = x_nchw.shape
    Cout, Cin_w, KH, KW = conv_weight_oihw.shape
    assert Cin == Cin_w

    Ho = (H + 2 * padding - dilation * (KH - 1) - 1) // stride + 1
    Wo = (W + 2 * padding - dilation * (KW - 1) - 1) // stride + 1
    K = Cin * KH * KW
    M = Ho * Wo
    NM = N * M

    # ---- XLA glue: bf16 zero-pad + im2col -> patches [K, N*M]; weights -> [Cout, K]. ----
    x_pad = jnp.pad(x_nchw.astype(jnp.bfloat16),
                    ((0, 0), (0, 0), (padding, padding), (padding, padding)))
    taps = []
    for kh in range(KH):
        for kw in range(KW):
            h0, w0 = kh * dilation, kw * dilation
            taps.append(jax.lax.slice(
                x_pad,
                (0, 0, h0, w0),
                (N, Cin, h0 + (Ho - 1) * stride + 1, w0 + (Wo - 1) * stride + 1),
                (1, 1, stride, stride)))                              # [N, Cin, Ho, Wo] bf16
    patches = jnp.stack(taps, axis=2)                                 # [N, Cin, KH*KW, Ho, Wo]
    # k = ci*KH*KW + kh*KW + kw (matches OIHW weight flatten); column = n*M + ho*Wo + wo.
    patches = jnp.transpose(patches, (1, 2, 0, 3, 4)).reshape(K, NM)  # [K, N*M] bf16
    w2 = conv_weight_oihw.reshape(Cout, K).astype(jnp.bfloat16)       # [Cout, K] bf16
    gamma2 = bn_gamma.astype(jnp.float32).reshape(Cout, 1)
    beta2 = bn_beta.astype(jnp.float32).reshape(Cout, 1)

    kernel = functools.partial(_fused_conv_bn_relu_kernel,
                               n_images=N, m_per_image=M, eps=eps)

    out_flat = pl.pallas_call(
        kernel,
        out_shape=jax.ShapeDtypeStruct((N, Cout, M), jnp.float32),
        grid=(1,),
        in_specs=[pl.BlockSpec((K, NM), lambda i: (0, 0)),
                  pl.BlockSpec((Cout, K), lambda i: (0, 0)),
                  pl.BlockSpec((Cout, 1), lambda i: (0, 0)),
                  pl.BlockSpec((Cout, 1), lambda i: (0, 0))],
        out_specs=pl.BlockSpec((N, Cout, M), lambda i: (0, 0, 0)),
        compiler_params=pltpu.CompilerParams(
            dimension_semantics=("arbitrary",),
            vmem_limit_bytes=32 * 1024 * 1024),
    )(patches, w2, gamma2, beta2)

    # [N, Cout, Ho*Wo] is flattened NCHW -> the final step is a free reshape (no transpose).
    return out_flat.reshape(N, Cout, Ho, Wo)


def _reference(x_nchw, conv_weight_oihw, bn_gamma, bn_beta, *,
               stride, padding, dilation, eps):
    """Pure-JAX f32 reference (conv -> train-mode BN -> ReLU)."""
    y = jax.lax.conv_general_dilated(
        x_nchw.astype(jnp.float32), conv_weight_oihw.astype(jnp.float32),
        window_strides=(stride, stride),
        padding=[(padding, padding), (padding, padding)],
        rhs_dilation=(dilation, dilation),
        dimension_numbers=("NCHW", "OIHW", "NCHW"))
    mean = jnp.mean(y, axis=(0, 2, 3), keepdims=True)
    var = jnp.mean((y - mean) ** 2, axis=(0, 2, 3), keepdims=True)
    yn = (y - mean) * jax.lax.rsqrt(var + eps)
    yn = yn * bn_gamma.reshape(1, -1, 1, 1) + bn_beta.reshape(1, -1, 1, 1)
    return jnp.maximum(yn, 0.0)


if __name__ == "__main__":
    # Module config: BasicConv2d(in_planes=4, out_planes=8, kernel_size=3,
    #                            stride=1, padding=1, dilation=1)
    in_planes, out_planes, ksize = 4, 8, 3
    stride, padding, dilation = 1, 1, 1
    N, H, W = 2, 16, 16

    key = jax.random.PRNGKey(0)
    kx, kw = jax.random.split(key)
    x = jax.random.normal(kx, (N, in_planes, H, W), dtype=jnp.float32)
    # Conv2d weight [Cout, Cin, KH, KW], bias=False. Deterministic init.
    conv_w = 0.1 * jax.random.normal(
        kw, (out_planes, in_planes, ksize, ksize), dtype=jnp.float32)
    # BatchNorm2d affine params (PyTorch defaults: gamma=1, beta=0).
    gamma = jnp.ones((out_planes,), dtype=jnp.float32)
    beta = jnp.zeros((out_planes,), dtype=jnp.float32)

    out = basic_conv2d(x, conv_w, gamma, beta,
                       stride=stride, padding=padding, dilation=dilation)
    out = jax.block_until_ready(out)

    ref = _reference(x, conv_w, gamma, beta,
                     stride=stride, padding=padding, dilation=dilation, eps=1e-5)
    assert out.shape == ref.shape == (N, out_planes, H, W)
    # bf16 patches/weights (f32 accumulation + f32 BN) -> tolerance loosened vs pure-f32.
    assert jnp.allclose(out, ref, rtol=3e-2, atol=3e-2), \
        f"max abs diff {jnp.max(jnp.abs(out - ref))}"

    print("KERNEL_OK")
</pallas_src>

<mosaic_0001>
module attributes {stable_mosaic.version = 11 : i64} {
  func.func @_fused_conv_bn_relu_kernel(%arg0: i32, %arg1: memref<36x512xbf16, #tpu.memory_space<vmem>>, %arg2: memref<8x36xbf16, #tpu.memory_space<vmem>>, %arg3: memref<8x1xf32, #tpu.memory_space<vmem>>, %arg4: memref<8x1xf32, #tpu.memory_space<vmem>>, %arg5: memref<2x8x256xf32, #tpu.memory_space<vmem>>) attributes {dimension_semantics = [#tpu.dimension_semantics<arbitrary>], iteration_bounds = array<i64: 1>, scalar_prefetch = 0 : i64, scratch_operands = 0 : i64, tpu.core_type = #tpu.core_type<tc>, window_params = [{pipeline_mode = #tpu.pipeline_mode<synchronous>, transform_indices = @transform_0, window_bounds = array<i64: 36, 512>}, {pipeline_mode = #tpu.pipeline_mode<synchronous>, transform_indices = @transform_1, window_bounds = array<i64: 8, 36>}, {pipeline_mode = #tpu.pipeline_mode<synchronous>, transform_indices = @transform_2, window_bounds = array<i64: 8, 1>}, {pipeline_mode = #tpu.pipeline_mode<synchronous>, transform_indices = @transform_3, window_bounds = array<i64: 8, 1>}, {pipeline_mode = #tpu.pipeline_mode<synchronous>, transform_indices = @transform_4, window_bounds = array<i64: 2, 8, 256>}]} {
    %c0 = arith.constant 0 : index
    %c0_0 = arith.constant 0 : index
    %0 = vector.load %arg2[%c0, %c0_0] : memref<8x36xbf16, #tpu.memory_space<vmem>>, vector<8x36xbf16>
    %c0_1 = arith.constant 0 : index
    %c0_2 = arith.constant 0 : index
    %1 = vector.load %arg1[%c0_1, %c0_2] : memref<36x512xbf16, #tpu.memory_space<vmem>>, vector<36x512xbf16>
    %cst = arith.constant dense<0.000000e+00> : vector<8x512xf32>
    %2 = tpu.matmul %0, %1, %cst {dimension_numbers = #tpu.dot_dimension_numbers<[1], [0], [0], [1], [0, 0, 1, 1], [], []>} : vector<8x36xbf16>, vector<36x512xbf16>, vector<8x512xf32> -> vector<8x512xf32>
    %cst_3 = arith.constant dense<0.000000e+00> : vector<8xf32>
    %3 = vector.multi_reduction <add>, %2, %cst_3 [1] : vector<8x512xf32> to vector<8xf32>
    %4 = vector.shape_cast %3 : vector<8xf32> to vector<8x1xf32>
    %cst_4 = arith.constant 5.120000e+02 : f32
    %5 = vector.broadcast %cst_4 : f32 to vector<8x1xf32>
    %6 = arith.divf %4, %5 : vector<8x1xf32>
    %7 = arith.mulf %2, %2 : vector<8x512xf32>
    %cst_5 = arith.constant dense<0.000000e+00> : vector<8xf32>
    %8 = vector.multi_reduction <add>, %7, %cst_5 [1] : vector<8x512xf32> to vector<8xf32>
    %9 = vector.shape_cast %8 : vector<8xf32> to vector<8x1xf32>
    %cst_6 = arith.constant 5.120000e+02 : f32
    %10 = vector.broadcast %cst_6 : f32 to vector<8x1xf32>
    %11 = arith.divf %9, %10 : vector<8x1xf32>
    %12 = arith.mulf %6, %6 : vector<8x1xf32>
    %13 = arith.subf %11, %12 : vector<8x1xf32>
    %cst_7 = arith.constant 0.000000e+00 : f32
    %14 = vector.broadcast %cst_7 : f32 to vector<8x1xf32>
    %15 = arith.maximumf %13, %14 : vector<8x1xf32>
    %cst_8 = arith.constant 9.99999974E-6 : f32
    %16 = vector.broadcast %cst_8 : f32 to vector<8x1xf32>
    %17 = arith.addf %15, %16 : vector<8x1xf32>
    %18 = math.rsqrt %17 : vector<8x1xf32>
    %c0_9 = arith.constant 0 : index
    %c0_10 = arith.constant 0 : index
    %19 = vector.load %arg3[%c0_9, %c0_10] : memref<8x1xf32, #tpu.memory_space<vmem>>, vector<8x1xf32>
    %20 = arith.mulf %19, %18 : vector<8x1xf32>
    %c0_11 = arith.constant 0 : index
    %c0_12 = arith.constant 0 : index
    %21 = vector.load %arg4[%c0_11, %c0_12] : memref<8x1xf32, #tpu.memory_space<vmem>>, vector<8x1xf32>
    %22 = arith.mulf %6, %20 : vector<8x1xf32>
    %23 = arith.subf %21, %22 : vector<8x1xf32>
    %24 = vector.broadcast %20 : vector<8x1xf32> to vector<8x512xf32>
    %25 = arith.mulf %2, %24 : vector<8x512xf32>
    %26 = vector.broadcast %23 : vector<8x1xf32> to vector<8x512xf32>
    %27 = arith.addf %25, %26 : vector<8x512xf32>
    %cst_13 = arith.constant 0.000000e+00 : f32
    %28 = vector.broadcast %cst_13 : f32 to vector<8x512xf32>
    %29 = arith.maximumf %27, %28 : vector<8x512xf32>
    %30 = vector.extract_strided_slice %29 {offsets = [0, 0], sizes = [8, 256], strides = [1, 1]} : vector<8x512xf32> to vector<8x256xf32>
    %c0_14 = arith.constant 0 : index
    %c0_15 = arith.constant 0 : index
    %c0_16 = arith.constant 0 : index
    %31 = vector.load %arg5[%c0_14, %c0_15, %c0_16] : memref<2x8x256xf32, #tpu.memory_space<vmem>>, vector<1x8x256xf32>
    %32 = vector.shape_cast %31 : vector<1x8x256xf32> to vector<8x256xf32>
    %33 = vector.shape_cast %30 : vector<8x256xf32> to vector<1x8x256xf32>
    tpu.vector_store %arg5[%c0_14, %c0_15, %c0_16], %33 {strides = array<i32>} : memref<2x8x256xf32, #tpu.memory_space<vmem>>, vector<1x8x256xf32>,
    %34 = vector.extract_strided_slice %29 {offsets = [0, 256], sizes = [8, 256], strides = [1, 1]} : vector<8x512xf32> to vector<8x256xf32>
    %c1 = arith.constant 1 : index
    %c0_17 = arith.constant 0 : index
    %c0_18 = arith.constant 0 : index
    %35 = vector.load %arg5[%c1, %c0_17, %c0_18] : memref<2x8x256xf32, #tpu.memory_space<vmem>>, vector<1x8x256xf32>
    %36 = vector.shape_cast %35 : vector<1x8x256xf32> to vector<8x256xf32>
    %37 = vector.shape_cast %34 : vector<8x256xf32> to vector<1x8x256xf32>
    tpu.vector_store %arg5[%c1, %c0_17, %c0_18], %37 {strides = array<i32>} : memref<2x8x256xf32, #tpu.memory_space<vmem>>, vector<1x8x256xf32>,
    return
  }
  func.func @transform_0(%arg0: i32) -> (i32, i32) {
    %c0_i32 = arith.constant 0 : i32
    %c0_i32_0 = arith.constant 0 : i32
    %c0_i32_1 = arith.constant 0 : i32
    return %c0_i32, %c0_i32_0 : i32, i32
  }
  func.func @transform_1(%arg0: i32) -> (i32, i32) {
    %c0_i32 = arith.constant 0 : i32
    %c0_i32_0 = arith.constant 0 : i32
    %c0_i32_1 = arith.constant 0 : i32
    return %c0_i32, %c0_i32_0 : i32, i32
  }
  func.func @transform_2(%arg0: i32) -> (i32, i32) {
    %c0_i32 = arith.constant 0 : i32
    %c0_i32_0 = arith.constant 0 : i32
    %c0_i32_1 = arith.constant 0 : i32
    return %c0_i32, %c0_i32_0 : i32, i32
  }
  func.func @transform_3(%arg0: i32) -> (i32, i32) {
    %c0_i32 = arith.constant 0 : i32
    %c0_i32_0 = arith.constant 0 : i32
    %c0_i32_1 = arith.constant 0 : i32
    return %c0_i32, %c0_i32_0 : i32, i32
  }
  func.func @transform_4(%arg0: i32) -> (i32, i32, i32) {
    %c0_i32 = arith.constant 0 : i32
    %c0_i32_0 = arith.constant 0 : i32
    %c0_i32_1 = arith.constant 0 : i32
    %c0_i32_2 = arith.constant 0 : i32
    return %c0_i32, %c0_i32_0, %c0_i32_1 : i32, i32, i32
  }
}

</mosaic_0001>

<llo_original>
// kernel: tpu_custom_call.1
$region0: #{tpu_custom_call.1}
  #allocation0 [shape = 'u32[]', space=smem, size = 0x4, offset = 0x4, fixed_abs, tag = 'smem constant byte address 0x4 - core index']
  #allocation1 [shape = 'u32[144,128]{1,0:T(1,128)}', space=vmem, size = 0x12000, scoped, tag = 'internal scratch']
  %s0 = inlined_call_operand.hbm [shape: bf16[36,512], index: 0, kind: input, shape index: {}]
  %s1 = inlined_call_operand.vmem [shape: bf16[8,36], index: 1, kind: input, shape index: {}]
  %s2 = inlined_call_operand.vmem [shape: f32[8,1], index: 2, kind: input, shape index: {}]
  %s3 = inlined_call_operand.vmem [shape: f32[8,1], index: 3, kind: input, shape index: {}]
  %s4 = inlined_call_operand.hbm [shape: f32[2,8,256], index: 4, kind: output, shape index: {}]
  %s5 = sld [smem:[#allocation0]]
  $region30: #{tpu_custom_call.1} parent=0
    _
  %s7 = ssub.s32 1, %s5
  %s8 = scalar_select 0, %s7, %s5
  $region1: #{tpu_custom_call.1} parent=0
    #allocation2 [shape = 'u8[40960]{0}', space=vmem, size = 0xa000, scoped, tag = 'input window, operand 0, single buffered']
    #allocation3 [shape = 's32[1]{0}', space=sflag, size = 0x4, scoped, tag = 'scoped memory for tpu_custom_call.1']
    #allocation4 [shape = 's32[1]{0}', space=sflag, size = 0x4, scoped, tag = 'scoped memory for tpu_custom_call.1']
    #allocation5 [shape = 'u8[16384]{0}', space=vmem, size = 0x4000, scoped, tag = 'output window, operand 0, single buffered']
    %9 = vsyncpa [#allocation3], 0
    %10 = vsyncpa [#allocation4], 0
    // Predicated region
    $region2: #{tpu_custom_call.1} parent=1 // pred_check
      _
    $region3: #{tpu_custom_call.1} parent=1 // pred_check_branch
      %12 = sbr.rel (0) target = $region5
    $region4: #{tpu_custom_call.1} parent=1 // pred_region
      %s14 = ssub.s32 1280, 1280
      %15 = vsyncadd [#allocation3], %s14
      %s16 = sshll.u32 [#allocation2], 4
      %s17 = int_to_ptr.vmem [resolvable:$true] %s16
      %22 = dma.hbm_to_vmem [thread:$0]  %s0, 1280, %s17, [#allocation3], 256, 256, 16
    $region5: #{tpu_custom_call.1} parent=1 // pred_fallthru
      _
    // Predicated region
    $region6: #{tpu_custom_call.1} parent=1 // pred_check
      _
    $region7: #{tpu_custom_call.1} parent=1 // pred_check_branch
      %24 = sbr.rel (0) target = $region9
    $region8: #{tpu_custom_call.1} parent=1 // pred_region
      _
    $region9: #{tpu_custom_call.1} parent=1 // pred_fallthru
      _
    // Predicated region
    $region10: #{tpu_custom_call.1} parent=1 // pred_check
      _
    $region11: #{tpu_custom_call.1} parent=1 // pred_check_branch
      %26 = sbr.rel (0) target = $region13
    $region12: #{tpu_custom_call.1} parent=1 // pred_region
      _
    $region13: #{tpu_custom_call.1} parent=1 // pred_fallthru
      _
    // Predicated region
    $region14: #{tpu_custom_call.1} parent=1 // pred_check
      _
    $region15: #{tpu_custom_call.1} parent=1 // pred_check_branch
      %28 = sbr.rel (0) target = $region17
    $region16: #{tpu_custom_call.1} parent=1 // pred_region
      _
    $region17: #{tpu_custom_call.1} parent=1 // pred_fallthru
      _
    // Predicated region
    $region18: #{tpu_custom_call.1} parent=1 // pred_check
      _
    $region19: #{tpu_custom_call.1} parent=1 // pred_check_branch
      %30 = sbr.rel (0) target = $region21
    $region20: #{tpu_custom_call.1} parent=1 // pred_region
      %31 = dma.done [#allocation3], 1280
    $region21: #{tpu_custom_call.1} parent=1 // pred_fallthru
      _
    %v33 = vld [vmem:[%s1] sm:$0xf]
    %v34 = vld [vmem:[#allocation2] sm:$0xff]
    %v35 = vld [vmem:[#allocation2 + $0x8] sm:$0xff]
    %v36 = vld [vmem:[#allocation2 + $0x10] sm:$0xff]
    %v37 = vld [vmem:[#allocation2 + $0x18] sm:$0xff]
    %v38 = vld [vmem:[#allocation2 + $0x20] sm:$0xff]
    %v39 = vld [vmem:[#allocation2 + $0x28] sm:$0xff]
    %v40 = vld [vmem:[#allocation2 + $0x30] sm:$0xff]
    %v41 = vld [vmem:[#allocation2 + $0x38] sm:$0xff]
    %v42 = vld [vmem:[#allocation2 + $0x40] sm:$0x33]
    %v43 = vld [vmem:[#allocation2 + $0x48] sm:$0x33]
    %v54 = vunpack.c.l.b16 %v34
    %v55 = vunpack.c.h.b16 %v34
    %v56 = vunpack.c.l.b16 %v35
    %v57 = vunpack.c.h.b16 %v35
    %v58 = vunpack.c.l.b16 %v36
    %v59 = vunpack.c.h.b16 %v36
    %v60 = vunpack.c.l.b16 %v37
    %v61 = vunpack.c.h.b16 %v37
    %v62 = vunpack.c.l.b16 %v38
    %v63 = vunpack.c.h.b16 %v38
    %v64 = vunpack.c.l.b16 %v39
    %v65 = vunpack.c.h.b16 %v39
    %v66 = vunpack.c.l.b16 %v40
    %v67 = vunpack.c.h.b16 %v40
    %v68 = vunpack.c.l.b16 %v41
    %v69 = vunpack.c.h.b16 %v41
    %v70 = vunpack.c.l.b16 %v42
    %v71 = vunpack.c.h.b16 %v42
    %v72 = vunpack.c.l.b16 %v43
    %v73 = vunpack.c.h.b16 %v43
    %v74 = vpack.c.b16 %v58, %v54
    %v75 = vpack.c.b16 %v59, %v55
    %v76 = vpack.c.b16 %v60, %v56
    %v77 = vpack.c.b16 %v61, %v57
    %v78 = vpack.c.b16 %v66, %v62
    %v79 = vpack.c.b16 %v67, %v63
    %v80 = vpack.c.b16 %v68, %v64
    %v81 = vpack.c.b16 %v69, %v65
    %v82 = vpack.c.b16 %v70, %v70
    %v83 = vpack.c.b16 %v71, %v71
    %v84 = vpack.c.b16 %v72, %v72
    %v85 = vpack.c.b16 %v73, %v73
    %vm94 = vcmask 293888
    %v96 = vsel %vm94, %v33, 0
    %vm98 = vcmask 1041408
    %v100 = vsel %vm98, %v82, 0
    %v103 = vsel %vm98, %v83, 0
    %v106 = vsel %vm98, %v84, 0
    %v109 = vsel %vm98, %v85, 0
    %111 = vmatprep.subr.bf16.mxu0 %v75
    %112 = vmatpush1.bf16.msra.mxu0 %v74
    %113 = vmatprep.subr.bf16.mxu0 %v79
    %114 = vmatpush1.bf16.msra.mxu0 %v78
    %115 = vmatprep.subr.bf16.mxu0 %v103
    %116 = vmatpush1.bf16.msra.mxu0 %v100
    %117 = vmatprep.subr.bf16.mxu0 0
    %118 = vmatpush1.bf16.msra.mxu0 0
    %119 = vmatprep.subr.bf16.mxu0 0
    %120 = vmatpush1.bf16.msra.mxu0 0
    %121 = vmatprep.subr.bf16.mxu0 0
    %122 = vmatpush1.bf16.msra.mxu0 0
    %123 = vmatprep.subr.bf16.mxu0 0
    %124 = vmatpush1.bf16.msra.mxu0 0
    %125 = vmatprep.subr.bf16.mxu0 0
    %126 = vmatpush1.bf16.msra.mxu0 0
    %127 = vmatprep.subr.bf16.mxu0 0
    %128 = vmatpush1.bf16.msra.mxu0 0
    %129 = vmatprep.subr.bf16.mxu0 0
    %130 = vmatpush1.bf16.msra.mxu0 0
    %131 = vmatprep.subr.bf16.mxu0 0
    %132 = vmatpush1.bf16.msra.mxu0 0
    %133 = vmatprep.subr.bf16.mxu0 0
    %134 = vmatpush1.bf16.msra.mxu0 0
    %135 = vmatprep.subr.bf16.mxu0 0
    %136 = vmatpush1.bf16.msra.mxu0 0
    %137 = vmatprep.subr.bf16.mxu0 0
    %138 = vmatpush1.bf16.msra.mxu0 0
    %139 = vmatprep.subr.bf16.mxu0 0
    %140 = vmatpush1.bf16.msra.mxu0 0
    %141 = vmatprep.subr.bf16.mxu0 0
    %142 = vmatpush1.bf16.msra.mxu0 0
    %143 = vmatprep.mubr.bf16.mxu0 0
    %144 = vmatmul.mubr.bf16.gmra.mrb[0].mxu0 %v96
    %v145 = vpop.f32.mrb[0].mxu0
    %v146 = vadd.f32 0.0, %v145
    %v147 = vpop.f32.mrb[0].mxu0
    %v148 = vadd.f32 0.0, %v147
    %v149 = vpop.f32.mrb[0].mxu0
    %v150 = vpop.f32.mrb[0].mxu0
    %151 = vdwg.mxu0
    %152 = vmatprep.subr.bf16.mxu0 %v77
    %153 = vmatpush1.bf16.msra.mxu0 %v76
    %154 = vmatprep.subr.bf16.mxu0 %v81
    %155 = vmatpush1.bf16.msra.mxu0 %v80
    %156 = vmatprep.subr.bf16.mxu0 %v109
    %157 = vmatpush1.bf16.msra.mxu0 %v106
    %158 = vmatprep.subr.bf16.mxu0 0
    %159 = vmatpush1.bf16.msra.mxu0 0
    %160 = vmatprep.subr.bf16.mxu0 0
    %161 = vmatpush1.bf16.msra.mxu0 0
    %162 = vmatprep.subr.bf16.mxu0 0
    %163 = vmatpush1.bf16.msra.mxu0 0
    %164 = vmatprep.subr.bf16.mxu0 0
    %165 = vmatpush1.bf16.msra.mxu0 0
    %166 = vmatprep.subr.bf16.mxu0 0
    %167 = vmatpush1.bf16.msra.mxu0 0
    %168 = vmatprep.subr.bf16.mxu0 0
    %169 = vmatpush1.bf16.msra.mxu0 0
    %170 = vmatprep.subr.bf16.mxu0 0
    %171 = vmatpush1.bf16.msra.mxu0 0
    %172 = vmatprep.subr.bf16.mxu0 0
    %173 = vmatpush1.bf16.msra.mxu0 0
    %174 = vmatprep.subr.bf16.mxu0 0
    %175 = vmatpush1.bf16.msra.mxu0 0
    %176 = vmatprep.subr.bf16.mxu0 0
    %177 = vmatpush1.bf16.msra.mxu0 0
    %178 = vmatprep.subr.bf16.mxu0 0
    %179 = vmatpush1.bf16.msra.mxu0 0
    %180 = vmatprep.subr.bf16.mxu0 0
    %181 = vmatpush1.bf16.msra.mxu0 0
    %182 = vmatprep.subr.bf16.mxu0 0
    %183 = vmatpush1.bf16.msra.mxu0 0
    %184 = vmatprep.mubr.bf16.mxu0 0
    %185 = vmatmul.mubr.bf16.gmra.mrb[0].mxu0 %v96
    %v186 = vpop.f32.mrb[0].mxu0
    %v187 = vadd.f32 0.0, %v186
    %v188 = vpop.f32.mrb[0].mxu0
    %v189 = vadd.f32 0.0, %v188
    %v190 = vpop.f32.mrb[0].mxu0
    %v191 = vpop.f32.mrb[0].mxu0
    %192 = vdwg.mxu0
    %v193 = vadd.f32 %v146, %v148
    %v194 = vadd.f32 %v193, %v187
    %v195 = vadd.f32 %v194, %v189
    %196 = vadd.xlane.f32.xlu0 %v195
    %v197 = vpop.xlane.xlu0 %196
    %v198 = vrcp.pop 512.0
    %v199 = vmul.f32 %v197, %v198
    %v200 = vmul.f32 %v146, %v146
    %v201 = vmul.f32 %v148, %v148
    %v202 = vmul.f32 %v187, %v187
    %v203 = vmul.f32 %v189, %v189
    %v204 = vadd.f32 %v200, %v201
    %v205 = vadd.f32 %v204, %v202
    %v206 = vadd.f32 %v205, %v203
    %207 = vadd.xlane.f32.xlu0 %v206
    %v208 = vpop.xlane.xlu0 %207
    %v209 = vmul.f32 %v208, %v198
    %v210 = vmul.f32 %v199, %v199
    %v211 = vsub.f32 %v209, %v210
    %v212 = vmax.f32 %v211, 0.0
    %v213 = vadd.f32 %v212, 1e-05
    %v214 = vrsqrt.pop %v213
    %v215 = vld [vmem:[%s2] sm:$0xff]
    %v216 = vmul.f32 %v215, %v214
    %v217 = vld [vmem:[%s3] sm:$0xff]
    %v218 = vmul.f32 %v199, %v216
    %v219 = vsub.f32 %v217, %v218
    %221 = vset.pattern.permute.xlu0 0
    %222 = vperm.xlu0 %221, %v216
    %v223 = vpop.permute.xlu0 %222
    %v225 = vmul.f32 %v146, %v223
    %v226 = vmul.f32 %v148, %v223
    %v227 = vmul.f32 %v187, %v223
    %v228 = vmul.f32 %v189, %v223
    %230 = vset.pattern.permute.xlu0 0
    %231 = vperm.xlu0 %230, %v219
    %v232 = vpop.permute.xlu0 %231
    %v234 = vadd.f32 %v225, %v232
    %v235 = vadd.f32 %v226, %v232
    %v236 = vadd.f32 %v227, %v232
    %v237 = vadd.f32 %v228, %v232
    %v238 = vmax.f32 %v234, 0.0
    %v239 = vmax.f32 %v235, 0.0
    %v240 = vmax.f32 %v236, 0.0
    %v241 = vmax.f32 %v237, 0.0
    %242 = vst [vmem:[#allocation5] sm:$0xff] %v238
    %243 = vst [vmem:[#allocation5 + $0x8] sm:$0xff] %v239
    %s244 = scalar_lea.vmem [#allocation5], 16
    %245 = vst [vmem:[%s244] sm:$0xff] %v240
    %246 = vst [vmem:[%s244 + $0x8] sm:$0xff] %v241
    // Predicated region
    $region22: #{tpu_custom_call.1} parent=1 // pred_check
      _
    $region23: #{tpu_custom_call.1} parent=1 // pred_check_branch
      %248 = sbr.rel (0) target = $region25
    $region24: #{tpu_custom_call.1} parent=1 // pred_region
      %s250 = ssub.s32 512, 512
      %251 = vsyncadd [#allocation4], %s250
      %s252 = sshll.u32 [#allocation5], 4
      %s253 = int_to_ptr.vmem [resolvable:$true] %s252
      %258 = dma.vmem_to_hbm [thread:$0]  %s253, 512, %s4, [#allocation4], 256, 256, 16
    $region25: #{tpu_custom_call.1} parent=1 // pred_fallthru
      _
    // Predicated region
    $region26: #{tpu_custom_call.1} parent=1 // pred_check
      _
    $region27: #{tpu_custom_call.1} parent=1 // pred_check_branch
      %260 = sbr.rel (0) target = $region29
    $region28: #{tpu_custom_call.1} parent=1 // pred_region
      %261 = dma.done [#allocation4], 512
    $region29: #{tpu_custom_call.1} parent=1 // pred_fallthru
      _
    %262 = vsyncpa [#allocation3], 1
    %263 = vsyncpa [#allocation4], 1

</llo_original>
